<compile_context>
chip_gen: v7x
topology: tpu7x:2x2x1
jax: 0.10.0
libtpu: 0.0.40
codegen_flags: <defaults>
</compile_context>

<pallas_src>
import functools

import jax
import jax.numpy as jnp
from jax.experimental import pallas as pl
from jax.experimental.pallas import tpu as pltpu  # noqa: F401  (TPU backend assumed)

REWARD_BASE = 0.6
REWARD_NOISE = 0.2

# Unused-by-forward parameters of nn.Linear(10, 1), initialized deterministically.
LINEAR_W = (jnp.arange(10, dtype=jnp.float32).reshape(1, 10) * 0.01)
LINEAR_B = jnp.zeros((1,), dtype=jnp.float32)


def _mock_reward_kernel(
    task_ref,   # (1, 1)     f32  VMEM -- task_factor = 0.1 * mean(task) (0 if no task)
    bits_ref,   # (rows,128) u32  VMEM -- seeded random bits, lane-dense
    out_ref,    # (rows,128) f32  VMEM -- rewards, lane-dense, row-major per batch elem
    *,
    reward_base: float,
    reward_noise: float,
):
    task_factor = task_ref[0, 0]

    # Map the top 23 bits of each uint32 into [0, 1).
    # (u32 -> s32 -> f32 casts; values < 2^23 so every step is exact.)
    bits = bits_ref[...]
    mant = (bits >> 9).astype(jnp.int32).astype(jnp.float32)   # [0, 2^23)
    uniform = mant * jnp.float32(1.0 / (1 << 23))               # [0, 1)

    out_ref[...] = reward_base + reward_noise * uniform + task_factor


def mock_reward_forward(x, task=None, reward_base=REWARD_BASE, reward_noise=REWARD_NOISE):
    """JAX/Pallas equivalent of MockRewardModel.forward. Returns shape (batch_size,)."""
    batch_size = int(x.shape[0]) if x.ndim > 3 else 1

    # ---- seed = int(abs(sum(x.reshape(-1)[:10]))) % 1000  (only touches 10 elems) ----
    n10 = min(10, int(x.size))
    first10 = jnp.reshape(x, (-1,))[:n10].astype(jnp.float32)
    abs_sum = jnp.abs(jnp.sum(first10))
    # floor+float-mod avoids int32 overflow for huge sums (matches trunc-then-mod).
    seed = jnp.mod(jnp.floor(abs_sum), 1000.0).astype(jnp.int32)

    # ---- task_factor = 0.1 * mean(task)  (0 if task is None or empty) ----
    if task is not None and int(task.size) > 0:
        task_factor = 0.1 * jnp.mean(task.astype(jnp.float32))
    else:
        task_factor = jnp.float32(0.0)
    task_factor = jnp.reshape(task_factor, (1, 1)).astype(jnp.float32)

    # ---- seeded random bits, packed lane-dense (rows x 128, row-major) ----
    # TODO(synk): torch.manual_seed uses a Mersenne-Twister stream; the exact bit
    # pattern of torch.rand is not reproducible here. Same semantics (data-derived
    # seed -> uniform [0,1)), different stream.
    lanes = 128
    rows = max(8, ((pl.cdiv(batch_size, lanes) + 7) // 8) * 8)
    key = jax.random.PRNGKey(seed)
    bits = jax.random.bits(key, (rows, lanes), dtype=jnp.uint32)

    kernel = functools.partial(
        _mock_reward_kernel,
        reward_base=float(reward_base),
        reward_noise=float(reward_noise),
    )

    out = pl.pallas_call(
        kernel,
        out_shape=jax.ShapeDtypeStruct((rows, lanes), jnp.float32),
        in_specs=[
            pl.BlockSpec((1, 1), lambda: (0, 0)),
            pl.BlockSpec((rows, lanes), lambda: (0, 0)),
        ],
        out_specs=pl.BlockSpec((rows, lanes), lambda: (0, 0)),
    )(task_factor, bits)

    # rewards.squeeze(-1): one reward per batch element, row-major from the tile.
    return out.reshape(-1)[:batch_size]


if __name__ == "__main__":
    key = jax.random.PRNGKey(0)
    kx, kt = jax.random.split(key)

    # x: a 4-D trajectory batch (NCHW-like), batch=2, channels=4, spatial=16.
    x = jax.random.normal(kx, (2, 4, 16, 16), dtype=jnp.float32)
    # task: a small task embedding, seq=8.
    task = jax.random.normal(kt, (8,), dtype=jnp.float32)

    rewards = mock_reward_forward(x, task)
    rewards = jax.block_until_ready(rewards)

    assert rewards.shape == (2,), rewards.shape
    assert rewards.dtype == jnp.float32

    # rewards ~ base + noise*U[0,1) + 0.1*mean(task); sanity-check the range.
    tf = 0.1 * float(jnp.mean(task))
    lo, hi = REWARD_BASE + tf, REWARD_BASE + REWARD_NOISE + tf
    assert bool(jnp.all(rewards >= lo - 1e-5)) and bool(jnp.all(rewards <= hi + 1e-5))

    # Also exercise the task=None path.
    r2 = jax.block_until_ready(mock_reward_forward(x))
    assert r2.shape == (2,)
    assert bool(jnp.all(r2 >= REWARD_BASE - 1e-5)) and bool(jnp.all(r2 <= REWARD_BASE + REWARD_NOISE + 1e-5))

    print("KERNEL_OK")
</pallas_src>

<mosaic_0001>
module attributes {stable_mosaic.version = 11 : i64} {
  func.func @_mock_reward_kernel(%arg0: memref<1x1xf32, #tpu.memory_space<vmem>>, %arg1: memref<8x128xi32, #tpu.memory_space<vmem>>, %arg2: memref<8x128xf32, #tpu.memory_space<vmem>>) attributes {dimension_semantics = [], scalar_prefetch = 0 : i64, scratch_operands = 0 : i64, tpu.core_type = #tpu.core_type<tc>} {
    %c0 = arith.constant 0 : index
    %c0_0 = arith.constant 0 : index
    %0 = vector.load %arg0[%c0, %c0_0] : memref<1x1xf32, #tpu.memory_space<vmem>>, vector<1x1xf32>
    %1 = vector.extract %0[0, 0] : f32 from vector<1x1xf32>
    %c0_1 = arith.constant 0 : index
    %c0_2 = arith.constant 0 : index
    %2 = vector.load %arg1[%c0_1, %c0_2] : memref<8x128xi32, #tpu.memory_space<vmem>>, vector<8x128xi32>
    %c9_i32 = arith.constant 9 : i32
    %3 = vector.broadcast %c9_i32 : i32 to vector<8x128xi32>
    %4 = arith.shrui %2, %3 : vector<8x128xi32>
    %5 = arith.sitofp %4 : vector<8x128xi32> to vector<8x128xf32>
    %cst = arith.constant 1.1920929E-7 : f32
    %6 = vector.broadcast %cst : f32 to vector<8x128xf32>
    %7 = arith.mulf %5, %6 : vector<8x128xf32>
    %cst_3 = arith.constant 2.000000e-01 : f32
    %8 = vector.broadcast %cst_3 : f32 to vector<8x128xf32>
    %9 = arith.mulf %8, %7 : vector<8x128xf32>
    %cst_4 = arith.constant 6.000000e-01 : f32
    %10 = vector.broadcast %cst_4 : f32 to vector<8x128xf32>
    %11 = arith.addf %10, %9 : vector<8x128xf32>
    %12 = vector.broadcast %1 : f32 to vector<8x128xf32>
    %13 = arith.addf %11, %12 : vector<8x128xf32>
    %c0_5 = arith.constant 0 : index
    %c0_6 = arith.constant 0 : index
    %14 = vector.load %arg2[%c0_5, %c0_6] : memref<8x128xf32, #tpu.memory_space<vmem>>, vector<8x128xf32>
    tpu.vector_store %arg2[%c0_5, %c0_6], %13 {strides = array<i32>} : memref<8x128xf32, #tpu.memory_space<vmem>>, vector<8x128xf32>,
    return
  }
}

</mosaic_0001>

<llo_original>
// kernel: tpu_custom_call.1
$region0: #{tpu_custom_call.1}
  #allocation0 [shape = 'u32[]', space=smem, size = 0x4, offset = 0x4, fixed_abs, tag = 'smem constant byte address 0x4 - core index']
  #allocation1 [shape = 'u32[144,128]{1,0:T(1,128)}', space=vmem, size = 0x12000, scoped, tag = 'internal scratch']
  #allocation2 [shape = 'f32[1,1]{1,0:T(1,128)S(1)}', space=vmem, size = 0x200, scoped, tag = 'scoped memory for tpu_custom_call.1']
  %s0 = inlined_call_operand.<no memory space> [shape: f32[1,1], index: 0, kind: input, shape index: {}]
  %s1 = inlined_call_operand.hbm [shape: u32[8,128], index: 1, kind: input, shape index: {}]
  %s2 = inlined_call_operand.hbm [shape: f32[8,128], index: 2, kind: output, shape index: {}]
  %s3 = sld [smem:[#allocation0]]
  $region22: #{tpu_custom_call.1} parent=0
    _
  %s5 = ssub.s32 1, %s3
  %s6 = scalar_select 0, %s5, %s3
  %v7 = vstv %s0
  %8 = vst [vmem:[#allocation2] sm:$0x1] %v7
  $region1: #{tpu_custom_call.1} parent=0
    #allocation3 [shape = 'u8[4096]{0}', space=vmem, size = 0x1000, scoped, tag = 'input window, operand 1, single buffered']
    #allocation4 [shape = 's32[1]{0}', space=sflag, size = 0x4, scoped, tag = 'scoped memory for tpu_custom_call.1']
    #allocation5 [shape = 's32[1]{0}', space=sflag, size = 0x4, scoped, tag = 'scoped memory for tpu_custom_call.1']
    #allocation6 [shape = 'u8[4096]{0}', space=vmem, size = 0x1000, scoped, tag = 'output window, operand 0, single buffered']
    %9 = vsyncpa [#allocation4], 0
    %10 = vsyncpa [#allocation5], 0
    // Predicated region
    $region2: #{tpu_custom_call.1} parent=1 // pred_check
      _
    $region3: #{tpu_custom_call.1} parent=1 // pred_check_branch
      %12 = sbr.rel (0) target = $region5
    $region4: #{tpu_custom_call.1} parent=1 // pred_region
      _
    $region5: #{tpu_custom_call.1} parent=1 // pred_fallthru
      _
    // Predicated region
    $region6: #{tpu_custom_call.1} parent=1 // pred_check
      _
    $region7: #{tpu_custom_call.1} parent=1 // pred_check_branch
      %14 = sbr.rel (0) target = $region9
    $region8: #{tpu_custom_call.1} parent=1 // pred_region
      %s16 = ssub.s32 128, 128
      %17 = vsyncadd [#allocation4], %s16
      %s19 = sshll.u32 [#allocation3], 4
      %s20 = int_to_ptr.vmem [resolvable:$true] %s19
      %22 = dma.hbm_to_vmem [thread:$0]  %s1, 128, %s20, [#allocation4]
    $region9: #{tpu_custom_call.1} parent=1 // pred_fallthru
      _
    // Predicated region
    $region10: #{tpu_custom_call.1} parent=1 // pred_check
      _
    $region11: #{tpu_custom_call.1} parent=1 // pred_check_branch
      %24 = sbr.rel (0) target = $region13
    $region12: #{tpu_custom_call.1} parent=1 // pred_region
      %25 = dma.done [#allocation4], 128
    $region13: #{tpu_custom_call.1} parent=1 // pred_fallthru
      _
    %v26 = vld [vmem:[#allocation2] sm:$0x1]
    %s27 = vtos %v26
    %v28 = vld [vmem:[#allocation3] sm:$0xff]
    %v29 = vshrl.u32 %v28, 9
    %v30 = vcvt.s32.f32 %v29
    %v31 = vmul.f32 %v30, 1.1920929e-07
    %v32 = vmul.f32 %v31, 0.2
    %v33 = vadd.f32 %v32, 0.6
    %v34 = vstv %s27
    %v35 = vadd.f32 %v33, %v34
    %36 = vst [vmem:[#allocation6] sm:$0xff] %v35
    // Predicated region
    $region14: #{tpu_custom_call.1} parent=1 // pred_check
      _
    $region15: #{tpu_custom_call.1} parent=1 // pred_check_branch
      %38 = sbr.rel (0) target = $region17
    $region16: #{tpu_custom_call.1} parent=1 // pred_region
      %s40 = ssub.s32 128, 128
      %41 = vsyncadd [#allocation5], %s40
      %s43 = sshll.u32 [#allocation6], 4
      %s44 = int_to_ptr.vmem [resolvable:$true] %s43
      %46 = dma.vmem_to_hbm [thread:$0]  %s44, 128, %s2, [#allocation5]
    $region17: #{tpu_custom_call.1} parent=1 // pred_fallthru
      _
    // Predicated region
    $region18: #{tpu_custom_call.1} parent=1 // pred_check
      _
    $region19: #{tpu_custom_call.1} parent=1 // pred_check_branch
      %48 = sbr.rel (0) target = $region21
    $region20: #{tpu_custom_call.1} parent=1 // pred_region
      %49 = dma.done [#allocation5], 128
    $region21: #{tpu_custom_call.1} parent=1 // pred_fallthru
      _
    %50 = vsyncpa [#allocation4], 1
    %51 = vsyncpa [#allocation5], 1

</llo_original>
